<compile_context>
chip_gen: v7x
topology: tpu7x:2x2x1
jax: 0.10.0
libtpu: 0.0.40
codegen_flags: <defaults>
</compile_context>

<pallas_src>
import functools

import jax
import jax.numpy as jnp
from jax.experimental import pallas as pl
from jax.experimental.pallas import tpu as pltpu


# ------------------------------- helpers --------------------------------------

def _round_up(x, m):
    return ((x + m - 1) // m) * m


def _largest_div_mult128(n, target):
    """Largest multiple-of-128 divisor of n that is <= target, else None."""
    t = (min(target, n) // 128) * 128
    while t >= 128:
        if n % t == 0:
            return t
        t -= 128
    return None


def _fold_params(params, eps):
    """Return (W[out,in], b[out], residual) with eval-mode BN folded in (f32)."""
    residual = params["proj_w"] is None
    if residual:
        scale = params["bn_gamma"] * jax.lax.rsqrt(params["bn_var"] + eps)
        shift = params["bn_beta"] - params["bn_mean"] * scale
        w = params["conv_w"][:, :, 0, 0] * scale[:, None]
        b = params["conv_b"] * scale + shift
    else:
        w = params["proj_w"][:, :, 0, 0]
        b = params["proj_b"]
    return w.astype(jnp.float32), b.astype(jnp.float32), residual


# ----------------------------- Pallas kernel ----------------------------------

def _conv_bn_relu_kernel(x_ref, w_ref, b_ref, o_ref, *,
                         residual, cout_tiled, tn, compute_dtype):
    """One (batch, hw-tile, cout-tile) grid step, NCHW layout (spatial on lanes).

    x_ref : (1, Cin, t_hw)  f32   activation tile (downcast to bf16 in-kernel for the MXU)
    w_ref : (tn, Cin)       bf16  BN-folded conv weight tile
    b_ref : (tn, 1)         f32   BN-folded bias tile
    o_ref : (1, tn, t_hw)

    residual=True : o = relu( relu(W' x + b') + x )   (in == mid == out channel)
    residual=False: o = relu( W x + b )               (projection conv1x1)
    """
    x = x_ref[0]                                                   # (Cin, t_hw), f32
    h = jnp.dot(w_ref[...], x.astype(compute_dtype),
                preferred_element_type=jnp.float32)                # MXU, f32 accumulate
    h = jnp.maximum(h + b_ref[...], 0.0)                           # bias(+BN) + inner ReLU
    if residual:
        if cout_tiled:
            j = pl.program_id(2)
            start = pl.multiple_of(j * tn, tn)
            xr = x_ref[0, pl.ds(start, tn), :]                     # matching channels, f32
        else:
            xr = x
        h = jnp.maximum(h + xr, 0.0)                               # + x, outer ReLU
    o_ref[0] = h.astype(o_ref.dtype)


# ----------------------------- pallas_call wrapper -----------------------------

def _run(x3, w, b_col, *, residual, t_hw, tn, out_dtype, vmem_limit, compute_dtype):
    n, cin, hw_pad = x3.shape
    cout = w.shape[0]
    cout_tiled = tn != cout
    grid = (n, hw_pad // t_hw, cout // tn)     # cout innermost -> x block not re-fetched
    kernel = functools.partial(_conv_bn_relu_kernel, residual=residual,
                               cout_tiled=cout_tiled, tn=tn, compute_dtype=compute_dtype)
    return pl.pallas_call(
        kernel,
        out_shape=jax.ShapeDtypeStruct((n, cout, hw_pad), out_dtype),
        grid_spec=pltpu.PrefetchScalarGridSpec(
            num_scalar_prefetch=0,
            grid=grid,
            in_specs=[
                # Full-Cin activation tile; the block index ignores j so the tile stays
                # resident across the whole inner cout sweep (no redundant activation DMA).
                pl.BlockSpec((1, cin, t_hw), lambda b, s, j: (b, 0, s)),
                pl.BlockSpec((tn, cin), lambda b, s, j: (j, 0)),
                pl.BlockSpec((tn, 1), lambda b, s, j: (j, 0)),
            ],
            out_specs=pl.BlockSpec((1, tn, t_hw), lambda b, s, j: (b, j, s)),
        ),
        compiler_params=pltpu.CompilerParams(
            dimension_semantics=("parallel", "parallel", "arbitrary"),
            vmem_limit_bytes=vmem_limit),
    )(x3, w, b_col)


# ----------------------------- module wrapper ----------------------------------

def init_params(key, in_ch, mid_ch, out_ch):
    ks = jax.random.split(key, 8)
    p = {
        # effective `features` after OrderedDict dedup: Conv2d(mid, out, 1) + BN(out) + ReLU
        "conv_w":  0.1 * jax.random.normal(ks[0], (out_ch, mid_ch, 1, 1), jnp.float32),
        "conv_b":  0.1 * jax.random.normal(ks[1], (out_ch,), jnp.float32),
        "bn_gamma": 1.0 + 0.1 * jax.random.normal(ks[2], (out_ch,), jnp.float32),
        "bn_beta":  0.1 * jax.random.normal(ks[3], (out_ch,), jnp.float32),
        "bn_mean":  0.1 * jax.random.normal(ks[4], (out_ch,), jnp.float32),
        "bn_var":   jnp.abs(jax.random.normal(ks[5], (out_ch,), jnp.float32)) + 0.5,
    }
    if in_ch != out_ch:
        p["proj_w"] = 0.1 * jax.random.normal(ks[6], (out_ch, in_ch, 1, 1), jnp.float32)
        p["proj_b"] = 0.1 * jax.random.normal(ks[7], (out_ch,), jnp.float32)
    else:
        p["proj_w"] = None      # conv1x1 == NULL/None case
        p["proj_b"] = None
    return p


def conv1x3x1_forward(params, x, *, eps=1e-5, compute_dtype=jnp.bfloat16,
                      out_dtype=None, tile_hw=2048, tile_n=512,
                      max_resident_weight_bytes=4 << 20,
                      vmem_budget_bytes=32 << 20):
    """x: NCHW float32.  Returns NCHW output matching the (deduped) PyTorch forward.

    out_dtype=None keeps x.dtype; pass jnp.bfloat16 to halve the store traffic.
    vmem_budget_bytes: tile-sizing budget (32 MiB default fits v7x's 64 MiB/TC with
    headroom; raise on v5e/v6e which have 128 MiB physical VMEM).
    """
    n, c, h, w_sp = x.shape
    hw = h * w_sp
    out_dtype = x.dtype if out_dtype is None else out_dtype

    wf, bf, residual = _fold_params(params, eps)
    cout, cin = wf.shape
    assert cin == c, "effective conv expects mid_channel == in_channel input"
    if residual:
        assert cout == c, "residual branch requires in == mid == out channel"

    wq = wf.astype(compute_dtype)           # bf16 weight (MXU-native, half the HBM bytes)
    b_col = bf.reshape(cout, 1)             # f32 epilogue bias

    # ---- Cout tiling: keep the small folded weight fully resident whenever it fits;
    #      only tile for genuinely large weights (then cout sits on the innermost axis).
    w_bytes = cin * cout * wq.dtype.itemsize
    if w_bytes <= max_resident_weight_bytes:
        tn = cout
    else:
        tn = _largest_div_mult128(cout, tile_n) or cout

    # ---- HW tile sized from the VMEM budget (x read as f32, downcast in-kernel).
    x_bpe = x.dtype.itemsize
    o_bpe = jnp.dtype(out_dtype).itemsize
    fixed = 2 * tn * cin * wq.dtype.itemsize + 8 * tn + (2 << 20)      # weights+bias+scratch
    per_lane = 2 * (cin * x_bpe + tn * o_bpe)                          # double-buffered x/out
    lane_cap = max((vmem_budget_bytes - fixed) // per_lane, 128)
    t_hw_cap = int(min(tile_hw, lane_cap))

    if hw <= t_hw_cap:
        t_hw, hw_pad = hw, hw                            # whole H*W in one lane-dense block
    else:
        d = _largest_div_mult128(hw, t_hw_cap)
        if d is not None:
            t_hw, hw_pad = d, hw                         # clean 128-multiple divisor, no pad
        else:
            # TODO(synk): ragged H*W needs a pad pass (one extra activation read+write).
            t_hw = max((t_hw_cap // 128) * 128, 128)
            hw_pad = _round_up(hw, t_hw)

    # v7x has 2 TensorCores: make sure the parallel axes offer at least 2 grid steps.
    if n * (hw_pad // t_hw) < 2 and t_hw % 256 == 0:
        t_hw //= 2

    x3 = x.reshape(n, c, hw)                             # free reshape, stays NCHW
    if hw_pad != hw:
        x3 = jnp.pad(x3, ((0, 0), (0, 0), (0, hw_pad - hw)))

    est = (2 * (cin * t_hw * x_bpe + tn * t_hw * o_bpe)
           + 2 * tn * cin * wq.dtype.itemsize + 8 * cout + (2 << 20))
    vmem_limit = int(max(est + (4 << 20), 16 << 20))     # computed from actual tile bytes

    y3 = _run(x3, wq, b_col, residual=residual, t_hw=t_hw, tn=tn,
              out_dtype=out_dtype, vmem_limit=vmem_limit, compute_dtype=compute_dtype)
    if hw_pad != hw:
        y3 = y3[:, :, :hw]
    return y3.reshape(n, cout, h, w_sp)


# ----------------------------- reference (plain JAX) ---------------------------

def reference_forward(params, x, *, eps=1e-5, compute_dtype=jnp.bfloat16):
    """Plain-JAX reference with identical eval-mode BN folding and identical operand
    rounding (weight + matmul-side activation in compute_dtype, f32 accumulation); the
    residual adds the original f32 x, matching the kernel."""
    wf, bf, residual = _fold_params(params, eps)
    wq = wf.astype(compute_dtype).astype(jnp.float32)
    xq = x.astype(compute_dtype).astype(jnp.float32)
    hh = jnp.einsum("oc,nchw->nohw", wq, xq, precision=jax.lax.Precision.HIGHEST)
    hh = jnp.maximum(hh + bf[None, :, None, None], 0.0)
    if residual:
        hh = jnp.maximum(hh + x.astype(jnp.float32), 0.0)
    return hh


# ----------------------------------- main --------------------------------------

if __name__ == "__main__":
    def run_case(name, key, n, hsp, wsp, in_ch, mid_ch, out_ch,
                 atol=1e-3, rtol=1e-3, **kw):
        kx, kp = jax.random.split(key)
        x = jax.random.normal(kx, (n, in_ch, hsp, wsp), jnp.float32)
        params = init_params(kp, in_ch, mid_ch, out_ch)
        y = jax.block_until_ready(conv1x3x1_forward(params, x, **kw))
        y_ref = reference_forward(params, x,
                                  compute_dtype=kw.get("compute_dtype", jnp.bfloat16))
        assert y.shape == (n, out_ch, hsp, wsp), (name, y.shape)
        err = float(jnp.max(jnp.abs(y.astype(jnp.float32) - y_ref)))
        assert bool(jnp.allclose(y.astype(jnp.float32), y_ref, atol=atol, rtol=rtol)), (name, err)

    keys = jax.random.split(jax.random.PRNGKey(0), 7)

    # Primary, spec-sized case: residual branch (conv1x1 is None), tiny channels.
    run_case("residual_small_c", keys[0], 2, 16, 16, 4, 4, 4)
    # Projection branch, tiny channels.
    run_case("proj_small_c", keys[1], 2, 16, 16, 4, 4, 8)
    # Residual branch, large channels: full MXU matmul, weight fully resident.
    run_case("residual_large_c", keys[2], 2, 16, 16, 128, 128, 128)
    # Projection branch, large channels: weight still resident (1-step cout axis).
    run_case("proj_large_c", keys[3], 2, 16, 16, 128, 128, 512)
    # Residual branch with FORCED cout tiling (exercises the in-kernel pl.ds residual slice).
    run_case("residual_tiled_cout", keys[4], 2, 16, 16, 256, 256, 256,
             max_resident_weight_bytes=0, tile_n=128)
    # Projection with forced cout tiling and batch=1 (exercises the >=2-step HW split).
    run_case("proj_tiled_cout_n1", keys[5], 1, 16, 16, 128, 128, 256,
             max_resident_weight_bytes=0, tile_n=128)
    # bf16 output option (halved store traffic) — looser tolerance for output rounding.
    run_case("residual_bf16_out", keys[6], 2, 16, 16, 128, 128, 128,
             out_dtype=jnp.bfloat16, atol=5e-2, rtol=1e-2)

    print("KERNEL_OK")
</pallas_src>

<mosaic_0001>
module attributes {stable_mosaic.version = 11 : i64} {
  func.func @_conv_bn_relu_kernel(%arg0: i32, %arg1: i32, %arg2: i32, %arg3: memref<1x4x256xf32, #tpu.memory_space<vmem>>, %arg4: memref<4x4xbf16, #tpu.memory_space<vmem>>, %arg5: memref<4x1xf32, #tpu.memory_space<vmem>>, %arg6: memref<1x4x256xf32, #tpu.memory_space<vmem>>) attributes {dimension_semantics = [#tpu.dimension_semantics<parallel>, #tpu.dimension_semantics<parallel>, #tpu.dimension_semantics<arbitrary>], iteration_bounds = array<i64: 2, 1, 1>, scalar_prefetch = 0 : i64, scratch_operands = 0 : i64, tpu.core_type = #tpu.core_type<tc>, window_params = [{transform_indices = @transform_0, window_bounds = array<i64: 1, 4, 256>}, {transform_indices = @transform_1, window_bounds = array<i64: 4, 4>}, {transform_indices = @transform_2, window_bounds = array<i64: 4, 1>}, {transform_indices = @transform_3, window_bounds = array<i64: 1, 4, 256>}]} {
    %c0 = arith.constant 0 : index
    %c0_0 = arith.constant 0 : index
    %c0_1 = arith.constant 0 : index
    %0 = vector.load %arg3[%c0, %c0_0, %c0_1] : memref<1x4x256xf32, #tpu.memory_space<vmem>>, vector<1x4x256xf32>
    %1 = vector.shape_cast %0 : vector<1x4x256xf32> to vector<4x256xf32>
    %c0_2 = arith.constant 0 : index
    %c0_3 = arith.constant 0 : index
    %2 = vector.load %arg4[%c0_2, %c0_3] : memref<4x4xbf16, #tpu.memory_space<vmem>>, vector<4x4xbf16>
    %3 = arith.truncf %1 : vector<4x256xf32> to vector<4x256xbf16>
    %cst = arith.constant dense<0.000000e+00> : vector<4x256xf32>
    %4 = tpu.matmul %2, %3, %cst {dimension_numbers = #tpu.dot_dimension_numbers<[1], [0], [0], [1], [0, 0, 1, 1], [], []>} : vector<4x4xbf16>, vector<4x256xbf16>, vector<4x256xf32> -> vector<4x256xf32>
    %c0_4 = arith.constant 0 : index
    %c0_5 = arith.constant 0 : index
    %5 = vector.load %arg5[%c0_4, %c0_5] : memref<4x1xf32, #tpu.memory_space<vmem>>, vector<4x1xf32>
    %6 = vector.broadcast %5 : vector<4x1xf32> to vector<4x256xf32>
    %7 = arith.addf %4, %6 : vector<4x256xf32>
    %cst_6 = arith.constant 0.000000e+00 : f32
    %8 = vector.broadcast %cst_6 : f32 to vector<4x256xf32>
    %9 = arith.maximumf %7, %8 : vector<4x256xf32>
    %10 = arith.addf %9, %1 : vector<4x256xf32>
    %cst_7 = arith.constant 0.000000e+00 : f32
    %11 = vector.broadcast %cst_7 : f32 to vector<4x256xf32>
    %12 = arith.maximumf %10, %11 : vector<4x256xf32>
    %c0_8 = arith.constant 0 : index
    %c0_9 = arith.constant 0 : index
    %c0_10 = arith.constant 0 : index
    %13 = vector.load %arg6[%c0_8, %c0_9, %c0_10] : memref<1x4x256xf32, #tpu.memory_space<vmem>>, vector<1x4x256xf32>
    %14 = vector.shape_cast %13 : vector<1x4x256xf32> to vector<4x256xf32>
    %15 = vector.shape_cast %12 : vector<4x256xf32> to vector<1x4x256xf32>
    tpu.vector_store %arg6[%c0_8, %c0_9, %c0_10], %15 {strides = array<i32>} : memref<1x4x256xf32, #tpu.memory_space<vmem>>, vector<1x4x256xf32>,
    return
  }
  func.func @transform_0(%arg0: i32, %arg1: i32, %arg2: i32) -> (i32, i32, i32) {
    %c0_i32 = arith.constant 0 : i32
    %c0_i32_0 = arith.constant 0 : i32
    return %arg0, %c0_i32, %arg1 : i32, i32, i32
  }
  func.func @transform_1(%arg0: i32, %arg1: i32, %arg2: i32) -> (i32, i32) {
    %c0_i32 = arith.constant 0 : i32
    %c0_i32_0 = arith.constant 0 : i32
    return %arg2, %c0_i32 : i32, i32
  }
  func.func @transform_2(%arg0: i32, %arg1: i32, %arg2: i32) -> (i32, i32) {
    %c0_i32 = arith.constant 0 : i32
    %c0_i32_0 = arith.constant 0 : i32
    return %arg2, %c0_i32 : i32, i32
  }
  func.func @transform_3(%arg0: i32, %arg1: i32, %arg2: i32) -> (i32, i32, i32) {
    %c0_i32 = arith.constant 0 : i32
    return %arg0, %arg2, %arg1 : i32, i32, i32
  }
}

</mosaic_0001>

<llo_original>
// kernel: tpu_custom_call.1
$region0: #{tpu_custom_call.1}
  #allocation0 [shape = 'u32[]', space=smem, size = 0x4, offset = 0x4, fixed_abs, tag = 'smem constant byte address 0x4 - core index']
  #allocation1 [shape = 'u32[144,128]{1,0:T(1,128)}', space=vmem, size = 0x12000, scoped, tag = 'internal scratch']
  %s0 = inlined_call_operand.hbm [shape: f32[2,4,256], index: 0, kind: input, shape index: {}]
  %s1 = inlined_call_operand.vmem [shape: bf16[4,4], index: 1, kind: input, shape index: {}]
  %s2 = inlined_call_operand.vmem [shape: f32[4,1], index: 2, kind: input, shape index: {}]
  %s3 = inlined_call_operand.hbm [shape: f32[2,4,256], index: 3, kind: output, shape index: {}]
  %s4 = sld [smem:[#allocation0]]
  $region49: #{tpu_custom_call.1} parent=0
    _
  %s6 = ssub.s32 1, %s4
  %s7 = scalar_select 0, %s6, %s4
  $region1: #{tpu_custom_call.1} parent=0
    #allocation2 [shape = 'u8[8192]{0}', space=vmem, size = 0x2000, scoped, tag = 'input window, operand 0']
    #allocation3 [shape = 's32[2]{0}', space=sflag, size = 0x8, scoped, tag = 'scoped memory for tpu_custom_call.1']
    #allocation4 [shape = 's32[2]{0}', space=sflag, size = 0x8, scoped, tag = 'scoped memory for tpu_custom_call.1']
    #allocation5 [shape = 'u8[8192]{0}', space=vmem, size = 0x2000, scoped, tag = 'output window, operand 0']
    %8 = vsyncpa [#allocation3], 0
    %s9 = scalar_lea.sflag [#allocation3], 1
    %10 = vsyncpa %s9, 0
    %11 = vsyncpa [#allocation4], 0
    %s12 = scalar_lea.sflag [#allocation4], 1
    %13 = vsyncpa %s12, 0
    loop: start=0, step=1, limit=4
    $region2: #{tpu_custom_call.1} parent=1 // loop_pre_header
      _
    $region3: #{tpu_custom_call.1} parent=1 // loop_header
      %s15 = sphi 0, %s19
      %p16 = scmp.ge.s32.totalorder %s15, 4
      %s22 = sphi 0, %s41
      %s23 = sphi 0, %s37
      %s24 = sphi 0, %s33
      %s25 = sphi 0, %s22
      %s26 = sphi 0, %s23
      %s27 = sphi 0, %s24
      %s28 = sphi 0, %s25
      %s29 = sphi 0, %s26
      %s30 = sphi 0, %s27
      %s46 = sphi 0, %s48
      %s49 = sphi 0, %s46
      %s50 = sphi 0, %s49
      %s66 = sphi 0, %s50
      %s72 = sphi 0, %s74
      %s75 = sphi 0, %s72
      %s76 = sphi 0, %s75
      %s92 = sphi 0, %s76
      %s98 = sphi 0, %s100
      %s101 = sphi 0, %s98
      %s102 = sphi 0, %s101
      %s118 = sphi 0, %s102
      %s128 = sphi 0, %s130
      %s131 = sphi 0, %s128
      %s132 = sphi 0, %s131
      %s148 = sphi 0, %s132
    $region4: #{tpu_custom_call.1} parent=1 // loop_header_branch
      %18 = sbr.rel (%p16) target = $region8
    $region5: #{tpu_custom_call.1} parent=1 // loop_body
      %s20 = ssub.s32 %s15, 1
      %s21 = ssub.s32 %s15, 2
      %s31 = sadd.s32 1, %s24
      %p32 = scmp.ge.s32.totalorder %s31, 1
      %s33 = scalar_select %p32, 0, %s31
      %s34 = sadd.s32 1, %s23
      %s35 = scalar_select %p32, %s34, %s23
      %p36 = scmp.ge.s32.totalorder %s35, 1
      %s37 = scalar_select %p36, 0, %s35
      %s38 = sadd.s32 1, %s22
      %s39 = scalar_select %p36, %s38, %s22
      %p40 = scmp.ge.s32.totalorder %s39, 2
      %s41 = scalar_select %p40, 0, %s39
      %s42 = ssub.s32 %s22, %s41
      %s43 = ssub.s32 %s23, %s37
      %s44 = sor.u32 %s42, %s43
      %p45 = scmp.eq.s32.totalorder %s44, 0
      %s47 = sadd.s32 %s46, 1
      %s48 = scalar_select %p45, %s46, %s47
      %p51 = pneg %p45
      %p52 = scmp.eq.s32.totalorder %s15, 1
      %p53 = por %p51, %p52
      %p54 = scmp.ne.s32.totalorder %s46, %s49
      %p55 = scmp.eq.s32.totalorder %s15, 0
      %p56 = por %p54, %p55
      %p57 = scmp.ne.s32.totalorder %s46, %s49
      %p58 = scmp.eq.s32.totalorder %s20, 1
      %p59 = por %p57, %p58
      %p60 = scmp.ne.s32.totalorder %s49, %s50
      %p61 = scmp.eq.s32.totalorder %s20, 0
      %p62 = por %p60, %p61
      %p63 = scmp.ne.s32.totalorder %s49, %s50
      %p64 = scmp.eq.s32.totalorder %s21, 1
      %p65 = por %p63, %p64
      %p67 = scmp.ne.s32.totalorder %s50, %s66
      %p68 = scmp.eq.s32.totalorder %s21, 0
      %p69 = por %p67, %p68
      %s70 = ssub.s32 %s24, %s33
      %p71 = scmp.eq.s32.totalorder %s70, 0
      %s73 = sadd.s32 %s72, 1
      %s74 = scalar_select %p71, %s72, %s73
      %p77 = pneg %p71
      %p78 = scmp.eq.s32.totalorder %s15, 1
      %p79 = por %p77, %p78
      %p80 = scmp.ne.s32.totalorder %s72, %s75
      %p81 = scmp.eq.s32.totalorder %s15, 0
      %p82 = por %p80, %p81
      %p83 = scmp.ne.s32.totalorder %s72, %s75
      %p84 = scmp.eq.s32.totalorder %s20, 1
      %p85 = por %p83, %p84
      %p86 = scmp.ne.s32.totalorder %s75, %s76
      %p87 = scmp.eq.s32.totalorder %s20, 0
      %p88 = por %p86, %p87
      %p89 = scmp.ne.s32.totalorder %s75, %s76
      %p90 = scmp.eq.s32.totalorder %s21, 1
      %p91 = por %p89, %p90
      %p93 = scmp.ne.s32.totalorder %s76, %s92
      %p94 = scmp.eq.s32.totalorder %s21, 0
      %p95 = por %p93, %p94
      %s96 = ssub.s32 %s24, %s33
      %p97 = scmp.eq.s32.totalorder %s96, 0
      %s99 = sadd.s32 %s98, 1
      %s100 = scalar_select %p97, %s98, %s99
      %p103 = pneg %p97
      %p104 = scmp.eq.s32.totalorder %s15, 1
      %p105 = por %p103, %p104
      %p106 = scmp.ne.s32.totalorder %s98, %s101
      %p107 = scmp.eq.s32.totalorder %s15, 0
      %p108 = por %p106, %p107
      %p109 = scmp.ne.s32.totalorder %s98, %s101
      %p110 = scmp.eq.s32.totalorder %s20, 1
      %p111 = por %p109, %p110
      %p112 = scmp.ne.s32.totalorder %s101, %s102
      %p113 = scmp.eq.s32.totalorder %s20, 0
      %p114 = por %p112, %p113
      %p115 = scmp.ne.s32.totalorder %s101, %s102
      %p116 = scmp.eq.s32.totalorder %s21, 1
      %p117 = por %p115, %p116
      %p119 = scmp.ne.s32.totalorder %s102, %s118
      %p120 = scmp.eq.s32.totalorder %s21, 0
      %p121 = por %p119, %p120
      %s122 = ssub.s32 %s22, %s41
      %s123 = ssub.s32 %s24, %s33
      %s124 = sor.u32 %s122, %s123
      %s125 = ssub.s32 %s23, %s37
      %s126 = sor.u32 %s124, %s125
      %p127 = scmp.eq.s32.totalorder %s126, 0
      %s129 = sadd.s32 %s128, 1
      %s130 = scalar_select %p127, %s128, %s129
      %p133 = pneg %p127
      %p134 = scmp.eq.s32.totalorder %s15, 1
      %p135 = por %p133, %p134
      %p136 = scmp.ne.s32.totalorder %s128, %s131
      %p137 = scmp.eq.s32.totalorder %s15, 0
      %p138 = por %p136, %p137
      %p139 = scmp.ne.s32.totalorder %s128, %s131
      %p140 = scmp.eq.s32.totalorder %s20, 1
      %p141 = por %p139, %p140
      %p142 = scmp.ne.s32.totalorder %s131, %s132
      %p143 = scmp.eq.s32.totalorder %s20, 0
      %p144 = por %p142, %p143
      %p145 = scmp.ne.s32.totalorder %s131, %s132
      %p146 = scmp.eq.s32.totalorder %s21, 1
      %p147 = por %p145, %p146
      %p149 = scmp.ne.s32.totalorder %s132, %s148
      %p150 = scmp.eq.s32.totalorder %s21, 0
      %p151 = por %p149, %p150
      %p152 = scmp.le.s32.totalorder 1, %s15
      %p153 = scmp.lt.s32.totalorder %s15, 3
      %p154 = pnand %p152, %p153
      %p155 = pneg %p154
      // Predicated region
      $region9: #{tpu_custom_call.1} parent=5 // pred_check
        _
      $region10: #{tpu_custom_call.1} parent=5 // pred_check_branch
        %157 = sbr.rel (%p154) target = $region12
      $region11: #{tpu_custom_call.1} parent=5 // pred_region
        %s158 = ssub.s32 %s15, 1
        // Predicated region
        $region13: #{tpu_custom_call.1} parent=11 // pred_check
          %p159 = pneg %p88
        $region14: #{tpu_custom_call.1} parent=11 // pred_check_branch
          %161 = sbr.rel (%p159) target = $region16
        $region15: #{tpu_custom_call.1} parent=11 // pred_region
          %p162 = scmp.lt.s32.totalorder %s27, 0
          %s163 = scalar_select %p162, %s27, 0
          %s164 = smul.addr %s163, 2
          %s165 = scalar_lea.vmem %s1, %s164
        $region16: #{tpu_custom_call.1} parent=11 // pred_fallthru
          _
        // Predicated region
        $region17: #{tpu_custom_call.1} parent=11 // pred_check
          %p166 = pneg %p114
        $region18: #{tpu_custom_call.1} parent=11 // pred_check_branch
          %168 = sbr.rel (%p166) target = $region20
        $region19: #{tpu_custom_call.1} parent=11 // pred_region
          %p169 = scmp.lt.s32.totalorder %s27, 0
          %s170 = scalar_select %p169, %s27, 0
          %s171 = smul.addr %s170, 4
          %s172 = scalar_lea.vmem %s2, %s171
        $region20: #{tpu_custom_call.1} parent=11 // pred_fallthru
          _
      $region12: #{tpu_custom_call.1} parent=5 // pred_fallthru
        _
      %p173 = scmp.lt.s32.totalorder %s15, 2
      // Predicated region
      $region21: #{tpu_custom_call.1} parent=5 // pred_check
        %p174 = pneg %p173
      $region22: #{tpu_custom_call.1} parent=5 // pred_check_branch
        %176 = sbr.rel (%p174) target = $region24
      $region23: #{tpu_custom_call.1} parent=5 // pred_region
        // Predicated region
        $region25: #{tpu_custom_call.1} parent=23 // pred_check
          %p177 = pneg %p56
        $region26: #{tpu_custom_call.1} parent=23 // pred_check_branch
          %179 = sbr.rel (%p177) target = $region28
        $region27: #{tpu_custom_call.1} parent=23 // pred_region
          %s180 = sand.u32 %s46, 1
          %s181 = scalar_lea.sflag [#allocation3], %s180
          %s182 = sand.u32 %s46, 1
          %s183 = smul.addr %s182, 8
          %s184 = scalar_lea.vmem [#allocation2], %s183
          %s185 = smul.u32 2, %s23
          %s187 = ssub.s32 128, 128
          %188 = vsyncadd %s181, %s187
          %s189 = smul.addr %s22, 2
          %s190 = sadd.s32 %s185, %s189
          %s191 = smul.addr %s190, 64
          %s192 = scalar_lea.hbm %s0, %s191
          %s194 = sshll.u32 %s184, 4
          %s195 = int_to_ptr.vmem [resolvable:$true] %s194
          %197 = dma.hbm_to_vmem [thread:$0]  %s192, 128, %s195, %s181
        $region28: #{tpu_custom_call.1} parent=23 // pred_fallthru
          _
      $region24: #{tpu_custom_call.1} parent=5 // pred_fallthru
        _
      %p198 = scmp.le.s32.totalorder 1, %s15
      %p199 = scmp.lt.s32.totalorder %s15, 3
      %p200 = pnand %p198, %p199
      %p201 = pneg %p200
      // Predicated region
      $region29: #{tpu_custom_call.1} parent=5 // pred_check
        _
      $region30: #{tpu_custom_call.1} parent=5 // pred_check_branch
        %203 = sbr.rel (%p200) target = $region32
      $region31: #{tpu_custom_call.1} parent=5 // pred_region
        %s204 = ssub.s32 %s15, 1
        %s205 = sand.u32 %s49, 1
        %s206 = scalar_lea.sflag [#allocation3], %s205
        %s207 = sand.u32 %s49, 1
        %s208 = smul.addr %s207, 8
        %s209 = scalar_lea.vmem [#allocation2], %s208
        // Predicated region
        $region33: #{tpu_custom_call.1} parent=31 // pred_check
          %p210 = pneg %p62
        $region34: #{tpu_custom_call.1} parent=31 // pred_check_branch
          %212 = sbr.rel (%p210) target = $region36
        $region35: #{tpu_custom_call.1} parent=31 // pred_region
          %213 = dma.done %s206, 128
        $region36: #{tpu_custom_call.1} parent=31 // pred_fallthru
          _
        %s214 = sand.u32 %s49, 1
        %s215 = scalar_lea.sflag [#allocation3], %s214
        %s216 = sand.u32 %s49, 1
        %s217 = smul.addr %s216, 8
        %s218 = scalar_lea.vmem [#allocation2], %s217
        %p219 = pneg %p62
        %p220 = pneg %p59
        %p221 = scmp.lt.s32.totalorder %s27, 0
        %s222 = scalar_select %p221, %s27, 0
        %s223 = smul.addr %s222, 2
        %s224 = scalar_lea.vmem %s1, %s223
        %p225 = pneg %p88
        %p226 = pneg %p85
        %p227 = scmp.lt.s32.totalorder %s27, 0
        %s228 = scalar_select %p227, %s27, 0
        %s229 = smul.addr %s228, 4
        %s230 = scalar_lea.vmem %s2, %s229
        %p231 = pneg %p114
        %p232 = pneg %p111
        %p233 = pneg %p144
        %p234 = pneg %p141
        %s235 = sand.u32 %s131, 1
        %s236 = scalar_lea.sflag [#allocation4], %s235
        %s237 = sand.u32 %s131, 1
        %s238 = smul.addr %s237, 8
        %s239 = scalar_lea.vmem [#allocation5], %s238
        %s240 = smul.u32 2, %s26
        %p241 = scmp.lt.s32.totalorder %s27, 0
        %s242 = scalar_select %p241, %s27, 0
        %s243 = smul.addr %s242, 2
        %s244 = scalar_lea.vmem %s1, %s243
        %p245 = scmp.lt.s32.totalorder %s27, 0
        %s246 = scalar_select %p245, %s27, 0
        %s247 = smul.addr %s246, 4
        %s248 = scalar_lea.vmem %s2, %s247
        %s249 = smul.u32 2, %s26
        %v251 = vld [vmem:[%s209] sm:$0xff]
        %v252 = vld [vmem:[%s244] sm:$0x3]
        %v254 = vcombine.high %v251, %v251
        %v256 = vpack.c.bf16 %v251, %v251
        %v257 = vpack.c.bf16 %v254, %v254
        %v258 = vld [vmem:[%s248] sm:$0xf]
        %260 = vset.pattern.permute.xlu0 0
        %261 = vperm.xlu0 %260, %v258
        %v262 = vpop.permute.xlu0 %261
        %vm264 = vcmask 31744
        %v266 = vsel %vm264, %v252, 0
        %vm268 = vcmask 1041408
        %v270 = vsel %vm268, %v256, 0
        %v273 = vsel %vm268, %v257, 0
        %275 = vmatprep.subr.bf16.mxu0 %v273
        %276 = vmatpush1.bf16.msra.mxu0 %v270
        %277 = vmatprep.subr.bf16.mxu0 0
        %278 = vmatpush1.bf16.msra.mxu0 0
        %279 = vmatprep.subr.bf16.mxu0 0
        %280 = vmatpush1.bf16.msra.mxu0 0
        %281 = vmatprep.subr.bf16.mxu0 0
        %282 = vmatpush1.bf16.msra.mxu0 0
        %283 = vmatprep.subr.bf16.mxu0 0
        %284 = vmatpush1.bf16.msra.mxu0 0
        %285 = vmatprep.subr.bf16.mxu0 0
        %286 = vmatpush1.bf16.msra.mxu0 0
        %287 = vmatprep.subr.bf16.mxu0 0
        %288 = vmatpush1.bf16.msra.mxu0 0
        %289 = vmatprep.subr.bf16.mxu0 0
        %290 = vmatpush1.bf16.msra.mxu0 0
        %291 = vmatprep.subr.bf16.mxu0 0
        %292 = vmatpush1.bf16.msra.mxu0 0
        %293 = vmatprep.subr.bf16.mxu0 0
        %294 = vmatpush1.bf16.msra.mxu0 0
        %295 = vmatprep.subr.bf16.mxu0 0
        %296 = vmatpush1.bf16.msra.mxu0 0
        %297 = vmatprep.subr.bf16.mxu0 0
        %298 = vmatpush1.bf16.msra.mxu0 0
        %299 = vmatprep.subr.bf16.mxu0 0
        %300 = vmatpush1.bf16.msra.mxu0 0
        %301 = vmatprep.subr.bf16.mxu0 0
        %302 = vmatpush1.bf16.msra.mxu0 0
        %303 = vmatprep.subr.bf16.mxu0 0
        %304 = vmatpush1.bf16.msra.mxu0 0
        %305 = vmatprep.subr.bf16.mxu0 0
        %306 = vmatpush1.bf16.msra.mxu0 0
        %307 = vmatprep.mubr.bf16.mxu0 0
        %308 = vmatmul.mubr.bf16.gmra.mrb[0].mxu0 %v266
        %v309 = vpop.f32.mrb[0].mxu0
        %v310 = vadd.f32 %v262, %v309
        %v311 = vpop.f32.mrb[0].mxu0
        %v312 = vadd.f32 %v262, %v311
        %v313 = vpop.f32.mrb[0].mxu0
        %v314 = vpop.f32.mrb[0].mxu0
        %315 = vdwg.mxu0
        %v316 = vmax.f32 %v310, 0.0
        %v317 = vmax.f32 %v312, 0.0
        %v318 = vadd.f32 %v316, %v251
        %v319 = vadd.f32 %v317, %v254
        %v320 = vmax.f32 %v318, 0.0
        %v321 = vmax.f32 %v319, 0.0
        %v324 = vcombine.low %v320, %v321
        %326 = vst [vmem:[%s239] sm:$0xff] %v324
        %s327 = sand.u32 %s131, 1
        %s328 = scalar_lea.sflag [#allocation4], %s327
        %s329 = sand.u32 %s131, 1
        %s330 = smul.addr %s329, 8
        %s331 = scalar_lea.vmem [#allocation5], %s330
        // Predicated region
        $region37: #{tpu_custom_call.1} parent=31 // pred_check
          %p332 = pneg %p141
        $region38: #{tpu_custom_call.1} parent=31 // pred_check_branch
          %334 = sbr.rel (%p332) target = $region40
        $region39: #{tpu_custom_call.1} parent=31 // pred_region
          %s335 = smul.u32 2, %s26
          %s337 = ssub.s32 128, 128
          %338 = vsyncadd %s328, %s337
          %s339 = smul.addr %s27, 2
          %s340 = sadd.s32 %s335, %s339
          %s341 = smul.addr %s25, 2
          %s342 = sadd.s32 %s340, %s341
          %s343 = smul.addr %s342, 64
          %s344 = scalar_lea.hbm %s3, %s343
          %s346 = sshll.u32 %s331, 4
          %s347 = int_to_ptr.vmem [resolvable:$true] %s346
          %349 = dma.vmem_to_hbm [thread:$0]  %s347, 128, %s344, %s328
        $region40: #{tpu_custom_call.1} parent=31 // pred_fallthru
          _
      $region32: #{tpu_custom_call.1} parent=5 // pred_fallthru
        _
      %p350 = scmp.le.s32.totalorder 2, %s15
      // Predicated region
      $region41: #{tpu_custom_call.1} parent=5 // pred_check
        %p351 = pneg %p350
      $region42: #{tpu_custom_call.1} parent=5 // pred_check_branch
        %353 = sbr.rel (%p351) target = $region44
      $region43: #{tpu_custom_call.1} parent=5 // pred_region
        %s354 = ssub.s32 %s15, 2
        // Predicated region
        $region45: #{tpu_custom_call.1} parent=43 // pred_check
          %p355 = pneg %p147
        $region46: #{tpu_custom_call.1} parent=43 // pred_check_branch
          %357 = sbr.rel (%p355) target = $region48
        $region47: #{tpu_custom_call.1} parent=43 // pred_region
          %s358 = sand.u32 %s132, 1
          %s359 = scalar_lea.sflag [#allocation4], %s358
          %s360 = sand.u32 %s132, 1
          %s361 = smul.addr %s360, 8
          %s362 = scalar_lea.vmem [#allocation5], %s361
          %363 = dma.done %s359, 128
        $region48: #{tpu_custom_call.1} parent=43 // pred_fallthru
          _
      $region44: #{tpu_custom_call.1} parent=5 // pred_fallthru
        _
    $region6: #{tpu_custom_call.1} parent=1 // loop_footer
      %s19 = sadd.s32 1, %s15
    $region7: #{tpu_custom_call.1} parent=1 // loop_footer_branch
      %14 = sbr.rel target = $region3
    $region8: #{tpu_custom_call.1} parent=1 // loop_exit
      _
    %364 = vsyncpa [#allocation3], 1
    %s365 = scalar_lea.sflag [#allocation3], 1
    %366 = vsyncpa %s365, 1
    %367 = vsyncpa [#allocation4], 1
    %s368 = scalar_lea.sflag [#allocation4], 1
    %369 = vsyncpa %s368, 1

</llo_original>
